<compile_context>
chip_gen: v7x
topology: tpu7x:2x2x1
jax: 0.10.0
libtpu: 0.0.40
codegen_flags: <defaults>
</compile_context>

<pallas_src>
import math

import jax
import jax.numpy as jnp
from jax.experimental import pallas as pl
from jax.experimental.pallas import tpu as pltpu


LANE = 128  # TPU lane width; layer *output* dims are padded to this.


def _round_up(n, m):
    return (n + m - 1) // m * m


def _layer_offsets(in_dims):
    """Static, sublane-aligned row offsets of each layer inside the weight slab."""
    offs, off = [], 0
    for k in in_dims:
        offs.append(off)
        off += _round_up(k, 8)
    return offs, off


def make_mlp_kernel(layer_dims):
    """Build a fused MLP kernel for static layer dims (in, h1, h2, h3, out)."""
    ks = tuple(layer_dims[:-1])   # per-layer input widths
    ns = tuple(layer_dims[1:])    # per-layer output widths
    offs, _ = _layer_offsets(ks)
    n_layers = len(ks)

    def kernel(x_ref, w_ref, b_ref, out_ref):
        # x_ref:   (tb, in_size)  f32 activations (row tile of the batch)
        # w_ref:   (rows, P)      bf16 packed weights, layer l at rows
        #                         [offs[l], offs[l]+ks[l])
        # b_ref:   (L, 1, P)      f32 packed biases
        # out_ref: (tb, out_size) f32
        #
        # Feed the MXU in bf16; keep all VPU work (bias add, ReLU) in f32.
        h = x_ref[...].astype(jnp.bfloat16)
        for l in range(n_layers):
            k, n, off = ks[l], ns[l], offs[l]
            w = w_ref[off:off + k, :]                       # (k, P) bf16, static slice
            z = jnp.dot(h, w, preferred_element_type=jnp.float32) + b_ref[l]
            if l < n_layers - 1:
                # Slice back to the true width before the next layer; padded
                # lanes are never consumed.
                h = jnp.maximum(z[:, :n], 0.0).astype(jnp.bfloat16)
            else:
                out_ref[...] = z[:, :n].astype(out_ref.dtype)

    return kernel


def pack_params(params):
    """Pack the 4 Linear layers into one bf16 weight slab and one f32 bias slab.

    Done once (outside the per-step forward) so the per-call path DMAs only
    two small contiguous slabs.  Returns (w_slab, b_slab, layer_dims).
    """
    ws = [params["w1"], params["w2"], params["w3"], params["w4"]]
    bs = [params["b1"], params["b2"], params["b3"], params["b4"]]
    ks = [w.shape[0] for w in ws]
    ns = [w.shape[1] for w in ws]
    layer_dims = tuple(ks) + (ns[-1],)

    P = _round_up(max(ns), LANE)
    offs, rows = _layer_offsets(ks)

    w_slab = jnp.zeros((rows, P), jnp.bfloat16)
    for off, w in zip(offs, ws):
        w_slab = w_slab.at[off:off + w.shape[0], :w.shape[1]].set(
            w.astype(jnp.bfloat16))

    b_slab = jnp.zeros((len(bs), 1, P), jnp.float32)
    for l, b in enumerate(bs):
        b_slab = b_slab.at[l, 0, :b.shape[-1]].set(
            b.reshape(-1).astype(jnp.float32))

    return w_slab, b_slab, layer_dims


def mlp_forward(x, w_slab, b_slab, layer_dims, *, block_rows=512):
    """x: (B, input_size) float32; returns (B, output_size) float32."""
    B, in_size = x.shape
    assert in_size == layer_dims[0]
    out_size = layer_dims[-1]

    # Row tile: whole batch in one step when it fits, otherwise sublane-aligned
    # tiles of block_rows rows (big default so large learn batches use few
    # grid steps; ~0.35 us per step overhead).
    if B <= block_rows:
        tb = B                       # block == full dim, no alignment needed
    else:
        tb = _round_up(block_rows, 8)
    grid = (pl.cdiv(B, tb),)

    kernel = make_mlp_kernel(layer_dims)

    # Cost estimate from the *real* layer dims, not padded ones.
    flops = 2 * B * sum(k * n for k, n in zip(layer_dims[:-1], layer_dims[1:]))
    bytes_accessed = (x.size * 4 + w_slab.size * 2 + b_slab.size * 4
                      + B * out_size * 4)

    return pl.pallas_call(
        kernel,
        out_shape=jax.ShapeDtypeStruct((B, out_size), jnp.float32),
        grid=grid,
        in_specs=[
            # Row tile of activations marches over the batch; last dim equals
            # the full array dim so no host-side padding is needed.
            pl.BlockSpec((tb, in_size), lambda i: (i, 0)),
            # Weight / bias slabs: same (full) block every step -> resident.
            pl.BlockSpec(w_slab.shape, lambda i: (0, 0)),
            pl.BlockSpec(b_slab.shape, lambda i: (0, 0, 0)),
        ],
        # Output written at its true (B, out_size) shape; no wrapper slice.
        out_specs=pl.BlockSpec((tb, out_size), lambda i: (i, 0)),
        compiler_params=pltpu.CompilerParams(
            # Only engages when the grid has >1 step (large learn batches);
            # for act-sized batches the grid is a single step.
            dimension_semantics=("parallel",),
        ),
        cost_estimate=pl.CostEstimate(
            flops=flops, transcendentals=0, bytes_accessed=bytes_accessed),
    )(x, w_slab, b_slab)


# ---------------------------------------------------------------------------
# Parameter init matching the PyTorch module (xavier_uniform_ weights,
# default nn.Linear bias init), stored transposed as (in, out).
# ---------------------------------------------------------------------------
def xavier_uniform(key, in_features, out_features):
    bound = math.sqrt(6.0 / (in_features + out_features))
    return jax.random.uniform(key, (in_features, out_features),
                              minval=-bound, maxval=bound, dtype=jnp.float32)


def linear_bias(key, in_features, out_features):
    bound = 1.0 / math.sqrt(in_features)
    return jax.random.uniform(key, (1, out_features),
                              minval=-bound, maxval=bound, dtype=jnp.float32)


def init_params(key, input_size, hidden_size, output_size):
    ks = jax.random.split(key, 8)
    return {
        "w1": xavier_uniform(ks[0], input_size, hidden_size),
        "b1": linear_bias(ks[1], input_size, hidden_size),
        "w2": xavier_uniform(ks[2], hidden_size, hidden_size),
        "b2": linear_bias(ks[3], hidden_size, hidden_size),
        "w3": xavier_uniform(ks[4], hidden_size, hidden_size),
        "b3": linear_bias(ks[5], hidden_size, hidden_size),
        "w4": xavier_uniform(ks[6], hidden_size, output_size),
        "b4": linear_bias(ks[7], hidden_size, output_size),
    }


def reference_forward(x, params):
    h = jnp.maximum(x @ params["w1"] + params["b1"], 0.0)
    h = jnp.maximum(h @ params["w2"] + params["b2"], 0.0)
    h = jnp.maximum(h @ params["w3"] + params["b3"], 0.0)
    return h @ params["w4"] + params["b4"]


if __name__ == "__main__":
    # Lunar-Lander-v2: state dim = 8, action dim = 4, hidden = 32.
    input_size, hidden_size, output_size = 8, 32, 4

    key = jax.random.PRNGKey(0)
    pkey, xkey = jax.random.split(key)
    params = init_params(pkey, input_size, hidden_size, output_size)

    # Pack/pad weights ONCE (bf16 slab); reuse for every forward call.
    w_slab, b_slab, layer_dims = pack_params(params)

    # bf16 weights vs f32 reference -> loosen tolerance accordingly.
    TOL = dict(atol=5e-2, rtol=5e-2)

    # 1) Typical replay minibatch, single grid step.
    x64 = jax.random.normal(xkey, (64, input_size), dtype=jnp.float32)
    out64 = mlp_forward(x64, w_slab, b_slab, layer_dims)
    jax.block_until_ready(out64)
    assert out64.shape == (64, output_size)
    assert jnp.allclose(out64, reference_forward(x64, params), **TOL)

    # 2) Same batch, forced multi-step grid (weight slab resident across steps).
    out64_tiled = mlp_forward(x64, w_slab, b_slab, layer_dims, block_rows=32)
    jax.block_until_ready(out64_tiled)
    assert jnp.allclose(out64_tiled, reference_forward(x64, params), **TOL)

    # 3) Odd-sized batch (no padding anywhere; block == full array).
    x50 = jax.random.normal(jax.random.PRNGKey(1), (50, input_size),
                            dtype=jnp.float32)
    out50 = mlp_forward(x50, w_slab, b_slab, layer_dims)
    jax.block_until_ready(out50)
    assert out50.shape == (50, output_size)
    assert jnp.allclose(out50, reference_forward(x50, params), **TOL)

    print("KERNEL_OK")
</pallas_src>

<mosaic_0001>
module attributes {stable_mosaic.version = 11 : i64} {
  func.func @kernel(%arg0: i32, %arg1: memref<64x8xf32, #tpu.memory_space<vmem>>, %arg2: memref<104x128xbf16, #tpu.memory_space<vmem>>, %arg3: memref<4x1x128xf32, #tpu.memory_space<vmem>>, %arg4: memref<64x4xf32, #tpu.memory_space<vmem>>) attributes {dimension_semantics = [#tpu.dimension_semantics<parallel>], iteration_bounds = array<i64: 1>, scalar_prefetch = 0 : i64, scratch_operands = 0 : i64, tpu.core_type = #tpu.core_type<tc>, window_params = [{transform_indices = @transform_0, window_bounds = array<i64: 64, 8>}, {pipeline_mode = #tpu.pipeline_mode<synchronous>, transform_indices = @transform_1, window_bounds = array<i64: 104, 128>}, {pipeline_mode = #tpu.pipeline_mode<synchronous>, transform_indices = @transform_2, window_bounds = array<i64: 4, 1, 128>}, {transform_indices = @transform_3, window_bounds = array<i64: 64, 4>}]} {
    %c0 = arith.constant 0 : index
    %c0_0 = arith.constant 0 : index
    %0 = vector.load %arg1[%c0, %c0_0] : memref<64x8xf32, #tpu.memory_space<vmem>>, vector<64x8xf32>
    %1 = arith.truncf %0 : vector<64x8xf32> to vector<64x8xbf16>
    %c0_1 = arith.constant 0 : index
    %c0_2 = arith.constant 0 : index
    %2 = vector.load %arg2[%c0_1, %c0_2] : memref<104x128xbf16, #tpu.memory_space<vmem>>, vector<8x128xbf16>
    %cst = arith.constant dense<0.000000e+00> : vector<64x128xf32>
    %3 = tpu.matmul %1, %2, %cst {dimension_numbers = #tpu.dot_dimension_numbers<[1], [0], [0], [1], [0, 0, 1, 1], [], []>} : vector<64x8xbf16>, vector<8x128xbf16>, vector<64x128xf32> -> vector<64x128xf32>
    %c0_3 = arith.constant 0 : index
    %c0_4 = arith.constant 0 : index
    %c0_5 = arith.constant 0 : index
    %4 = vector.load %arg3[%c0_3, %c0_4, %c0_5] : memref<4x1x128xf32, #tpu.memory_space<vmem>>, vector<1x1x128xf32>
    %5 = vector.shape_cast %4 : vector<1x1x128xf32> to vector<1x128xf32>
    %6 = vector.broadcast %5 : vector<1x128xf32> to vector<64x128xf32>
    %7 = arith.addf %3, %6 : vector<64x128xf32>
    %8 = vector.extract_strided_slice %7 {offsets = [0, 0], sizes = [64, 32], strides = [1, 1]} : vector<64x128xf32> to vector<64x32xf32>
    %cst_6 = arith.constant 0.000000e+00 : f32
    %9 = vector.broadcast %cst_6 : f32 to vector<64x32xf32>
    %10 = arith.maximumf %8, %9 : vector<64x32xf32>
    %11 = arith.truncf %10 : vector<64x32xf32> to vector<64x32xbf16>
    %c8 = arith.constant 8 : index
    %c0_7 = arith.constant 0 : index
    %12 = vector.load %arg2[%c8, %c0_7] : memref<104x128xbf16, #tpu.memory_space<vmem>>, vector<32x128xbf16>
    %cst_8 = arith.constant dense<0.000000e+00> : vector<64x128xf32>
    %13 = tpu.matmul %11, %12, %cst_8 {dimension_numbers = #tpu.dot_dimension_numbers<[1], [0], [0], [1], [0, 0, 1, 1], [], []>} : vector<64x32xbf16>, vector<32x128xbf16>, vector<64x128xf32> -> vector<64x128xf32>
    %c1 = arith.constant 1 : index
    %c0_9 = arith.constant 0 : index
    %c0_10 = arith.constant 0 : index
    %14 = vector.load %arg3[%c1, %c0_9, %c0_10] : memref<4x1x128xf32, #tpu.memory_space<vmem>>, vector<1x1x128xf32>
    %15 = vector.shape_cast %14 : vector<1x1x128xf32> to vector<1x128xf32>
    %16 = vector.broadcast %15 : vector<1x128xf32> to vector<64x128xf32>
    %17 = arith.addf %13, %16 : vector<64x128xf32>
    %18 = vector.extract_strided_slice %17 {offsets = [0, 0], sizes = [64, 32], strides = [1, 1]} : vector<64x128xf32> to vector<64x32xf32>
    %cst_11 = arith.constant 0.000000e+00 : f32
    %19 = vector.broadcast %cst_11 : f32 to vector<64x32xf32>
    %20 = arith.maximumf %18, %19 : vector<64x32xf32>
    %21 = arith.truncf %20 : vector<64x32xf32> to vector<64x32xbf16>
    %c40 = arith.constant 40 : index
    %c0_12 = arith.constant 0 : index
    %22 = vector.load %arg2[%c40, %c0_12] : memref<104x128xbf16, #tpu.memory_space<vmem>>, vector<32x128xbf16>
    %cst_13 = arith.constant dense<0.000000e+00> : vector<64x128xf32>
    %23 = tpu.matmul %21, %22, %cst_13 {dimension_numbers = #tpu.dot_dimension_numbers<[1], [0], [0], [1], [0, 0, 1, 1], [], []>} : vector<64x32xbf16>, vector<32x128xbf16>, vector<64x128xf32> -> vector<64x128xf32>
    %c2 = arith.constant 2 : index
    %c0_14 = arith.constant 0 : index
    %c0_15 = arith.constant 0 : index
    %24 = vector.load %arg3[%c2, %c0_14, %c0_15] : memref<4x1x128xf32, #tpu.memory_space<vmem>>, vector<1x1x128xf32>
    %25 = vector.shape_cast %24 : vector<1x1x128xf32> to vector<1x128xf32>
    %26 = vector.broadcast %25 : vector<1x128xf32> to vector<64x128xf32>
    %27 = arith.addf %23, %26 : vector<64x128xf32>
    %28 = vector.extract_strided_slice %27 {offsets = [0, 0], sizes = [64, 32], strides = [1, 1]} : vector<64x128xf32> to vector<64x32xf32>
    %cst_16 = arith.constant 0.000000e+00 : f32
    %29 = vector.broadcast %cst_16 : f32 to vector<64x32xf32>
    %30 = arith.maximumf %28, %29 : vector<64x32xf32>
    %31 = arith.truncf %30 : vector<64x32xf32> to vector<64x32xbf16>
    %c72 = arith.constant 72 : index
    %c0_17 = arith.constant 0 : index
    %32 = vector.load %arg2[%c72, %c0_17] : memref<104x128xbf16, #tpu.memory_space<vmem>>, vector<32x128xbf16>
    %cst_18 = arith.constant dense<0.000000e+00> : vector<64x128xf32>
    %33 = tpu.matmul %31, %32, %cst_18 {dimension_numbers = #tpu.dot_dimension_numbers<[1], [0], [0], [1], [0, 0, 1, 1], [], []>} : vector<64x32xbf16>, vector<32x128xbf16>, vector<64x128xf32> -> vector<64x128xf32>
    %c3 = arith.constant 3 : index
    %c0_19 = arith.constant 0 : index
    %c0_20 = arith.constant 0 : index
    %34 = vector.load %arg3[%c3, %c0_19, %c0_20] : memref<4x1x128xf32, #tpu.memory_space<vmem>>, vector<1x1x128xf32>
    %35 = vector.shape_cast %34 : vector<1x1x128xf32> to vector<1x128xf32>
    %36 = vector.broadcast %35 : vector<1x128xf32> to vector<64x128xf32>
    %37 = arith.addf %33, %36 : vector<64x128xf32>
    %38 = vector.extract_strided_slice %37 {offsets = [0, 0], sizes = [64, 4], strides = [1, 1]} : vector<64x128xf32> to vector<64x4xf32>
    %c0_21 = arith.constant 0 : index
    %c0_22 = arith.constant 0 : index
    %39 = vector.load %arg4[%c0_21, %c0_22] : memref<64x4xf32, #tpu.memory_space<vmem>>, vector<64x4xf32>
    tpu.vector_store %arg4[%c0_21, %c0_22], %38 {strides = array<i32>} : memref<64x4xf32, #tpu.memory_space<vmem>>, vector<64x4xf32>,
    return
  }
  func.func @transform_0(%arg0: i32) -> (i32, i32) {
    %c0_i32 = arith.constant 0 : i32
    %c0_i32_0 = arith.constant 0 : i32
    return %arg0, %c0_i32 : i32, i32
  }
  func.func @transform_1(%arg0: i32) -> (i32, i32) {
    %c0_i32 = arith.constant 0 : i32
    %c0_i32_0 = arith.constant 0 : i32
    %c0_i32_1 = arith.constant 0 : i32
    return %c0_i32, %c0_i32_0 : i32, i32
  }
  func.func @transform_2(%arg0: i32) -> (i32, i32, i32) {
    %c0_i32 = arith.constant 0 : i32
    %c0_i32_0 = arith.constant 0 : i32
    %c0_i32_1 = arith.constant 0 : i32
    %c0_i32_2 = arith.constant 0 : i32
    return %c0_i32, %c0_i32_0, %c0_i32_1 : i32, i32, i32
  }
  func.func @transform_3(%arg0: i32) -> (i32, i32) {
    %c0_i32 = arith.constant 0 : i32
    %c0_i32_0 = arith.constant 0 : i32
    return %arg0, %c0_i32 : i32, i32
  }
}

</mosaic_0001>

<llo_original>
// kernel: tpu_custom_call.1
$region0: #{tpu_custom_call.1}
  #allocation0 [shape = 'u32[]', space=smem, size = 0x4, offset = 0x4, fixed_abs, tag = 'smem constant byte address 0x4 - core index']
  #allocation1 [shape = 'u32[144,128]{1,0:T(1,128)}', space=vmem, size = 0x12000, scoped, tag = 'internal scratch']
  %s0 = inlined_call_operand.vmem [shape: f32[64,8], index: 0, kind: input, shape index: {}]
  %s1 = inlined_call_operand.vmem [shape: bf16[104,128], index: 1, kind: input, shape index: {}]
  %s2 = inlined_call_operand.vmem [shape: f32[4,1,128], index: 2, kind: input, shape index: {}]
  %s3 = inlined_call_operand.vmem [shape: f32[64,4], index: 3, kind: output, shape index: {}]
  %s4 = sld [smem:[#allocation0]]
  $region22: #{tpu_custom_call.1} parent=0
    _
  %s6 = ssub.s32 1, %s4
  %s7 = scalar_select 0, %s6, %s4
  // Predicated region
  $region2: #{tpu_custom_call.1} parent=0 // pred_check
    _
  $region3: #{tpu_custom_call.1} parent=0 // pred_check_branch
    %9 = sbr.rel (0) target = $region5
  $region4: #{tpu_custom_call.1} parent=0 // pred_region
    _
  $region5: #{tpu_custom_call.1} parent=0 // pred_fallthru
    _
  // Predicated region
  $region6: #{tpu_custom_call.1} parent=0 // pred_check
    _
  $region7: #{tpu_custom_call.1} parent=0 // pred_check_branch
    %11 = sbr.rel (0) target = $region9
  $region8: #{tpu_custom_call.1} parent=0 // pred_region
    _
  $region9: #{tpu_custom_call.1} parent=0 // pred_fallthru
    _
  // Predicated region
  $region10: #{tpu_custom_call.1} parent=0 // pred_check
    _
  $region11: #{tpu_custom_call.1} parent=0 // pred_check_branch
    %13 = sbr.rel (0) target = $region13
  $region12: #{tpu_custom_call.1} parent=0 // pred_region
    _
  $region13: #{tpu_custom_call.1} parent=0 // pred_fallthru
    _
  %v15 = vld [vmem:[%s0] sm:$0xff]
  %v16 = vld [vmem:[%s0 + $0x8] sm:$0xff]
  %v17 = vld [vmem:[%s0 + $0x10] sm:$0xff]
  %v18 = vld [vmem:[%s0 + $0x18] sm:$0xff]
  %v19 = vld [vmem:[%s0 + $0x20] sm:$0xff]
  %v20 = vld [vmem:[%s0 + $0x28] sm:$0xff]
  %v21 = vld [vmem:[%s0 + $0x30] sm:$0xff]
  %v22 = vld [vmem:[%s0 + $0x38] sm:$0xff]
  %v23 = vpack.c.bf16 %v16, %v15
  %v24 = vpack.c.bf16 %v18, %v17
  %v25 = vpack.c.bf16 %v20, %v19
  %v26 = vpack.c.bf16 %v22, %v21
  %v27 = vld [vmem:[%s1] sm:$0xf]
  %v28 = vld [vmem:[%s2] sm:$0x1]
  %v30 = vlaneseq
  %v31 = vshrl.u32 %v30, 7
  %v32 = vsub.s32 0, %v31
  %v33 = vrot.slane %v28, %v32
  %vm35 = vcmask 64512
  %v37 = vsel %vm35, %v23, 0
  %v40 = vsel %vm35, %v24, 0
  %v43 = vsel %vm35, %v25, 0
  %v46 = vsel %vm35, %v26, 0
  %vm48 = vcmask 1043456
  %v50 = vsel %vm48, %v27, 0
  %52 = vmatprep.subr.bf16.mxu0 0
  %53 = vmatpush1.bf16.msra.mxu0 %v50
  %54 = vmatprep.subr.bf16.mxu0 0
  %55 = vmatpush1.bf16.msra.mxu0 0
  %56 = vmatprep.subr.bf16.mxu0 0
  %57 = vmatpush1.bf16.msra.mxu0 0
  %58 = vmatprep.subr.bf16.mxu0 0
  %59 = vmatpush1.bf16.msra.mxu0 0
  %60 = vmatprep.subr.bf16.mxu0 0
  %61 = vmatpush1.bf16.msra.mxu0 0
  %62 = vmatprep.subr.bf16.mxu0 0
  %63 = vmatpush1.bf16.msra.mxu0 0
  %64 = vmatprep.subr.bf16.mxu0 0
  %65 = vmatpush1.bf16.msra.mxu0 0
  %66 = vmatprep.subr.bf16.mxu0 0
  %67 = vmatpush1.bf16.msra.mxu0 0
  %68 = vmatprep.subr.bf16.mxu0 0
  %69 = vmatpush1.bf16.msra.mxu0 0
  %70 = vmatprep.subr.bf16.mxu0 0
  %71 = vmatpush1.bf16.msra.mxu0 0
  %72 = vmatprep.subr.bf16.mxu0 0
  %73 = vmatpush1.bf16.msra.mxu0 0
  %74 = vmatprep.subr.bf16.mxu0 0
  %75 = vmatpush1.bf16.msra.mxu0 0
  %76 = vmatprep.subr.bf16.mxu0 0
  %77 = vmatpush1.bf16.msra.mxu0 0
  %78 = vmatprep.subr.bf16.mxu0 0
  %79 = vmatpush1.bf16.msra.mxu0 0
  %80 = vmatprep.subr.bf16.mxu0 0
  %81 = vmatpush1.bf16.msra.mxu0 0
  %82 = vmatprep.subr.bf16.mxu0 0
  %83 = vmatpush1.bf16.msra.mxu0 0
  %84 = vmatprep.mubr.bf16.mxu0 0
  %85 = vmatmul.mubr.bf16.gmra.mrb[0].mxu0 %v37
  %v86 = vpop.f32.mrb[0].mxu0
  %v87 = vadd.f32 %v33, %v86
  %v88 = vpop.f32.mrb[0].mxu0
  %v89 = vpop.f32.mrb[0].mxu0
  %v90 = vadd.f32 %v33, %v89
  %v91 = vpop.f32.mrb[0].mxu0
  %92 = vmatprep.mubr.bf16.mxu0 0
  %93 = vmatmul.mubr.bf16.gmra.mrb[0].mxu0 %v40
  %v94 = vpop.f32.mrb[0].mxu0
  %v95 = vadd.f32 %v33, %v94
  %v96 = vpop.f32.mrb[0].mxu0
  %v97 = vpop.f32.mrb[0].mxu0
  %v98 = vadd.f32 %v33, %v97
  %v99 = vpop.f32.mrb[0].mxu0
  %100 = vmatprep.mubr.bf16.mxu0 0
  %101 = vmatmul.mubr.bf16.gmra.mrb[0].mxu0 %v43
  %v102 = vpop.f32.mrb[0].mxu0
  %v103 = vadd.f32 %v33, %v102
  %v104 = vpop.f32.mrb[0].mxu0
  %v105 = vpop.f32.mrb[0].mxu0
  %v106 = vadd.f32 %v33, %v105
  %v107 = vpop.f32.mrb[0].mxu0
  %108 = vmatprep.mubr.bf16.mxu0 0
  %109 = vmatmul.mubr.bf16.gmra.mrb[0].mxu0 %v46
  %v110 = vpop.f32.mrb[0].mxu0
  %v111 = vadd.f32 %v33, %v110
  %v112 = vpop.f32.mrb[0].mxu0
  %v113 = vpop.f32.mrb[0].mxu0
  %v114 = vadd.f32 %v33, %v113
  %v115 = vpop.f32.mrb[0].mxu0
  %116 = vdwg.mxu0
  %v117 = vmax.f32 %v87, 0.0
  %v118 = vmax.f32 %v90, 0.0
  %v119 = vmax.f32 %v95, 0.0
  %v120 = vmax.f32 %v98, 0.0
  %v121 = vmax.f32 %v103, 0.0
  %v122 = vmax.f32 %v106, 0.0
  %v123 = vmax.f32 %v111, 0.0
  %v124 = vmax.f32 %v114, 0.0
  %v125 = vpack.c.bf16 %v118, %v117
  %v126 = vpack.c.bf16 %v120, %v119
  %v127 = vpack.c.bf16 %v122, %v121
  %v128 = vpack.c.bf16 %v124, %v123
  %v129 = vld [vmem:[%s1 + $0x4] sm:$0xf]
  %v130 = vld [vmem:[%s1 + $0x8] sm:$0xf]
  %v131 = vld [vmem:[%s1 + $0xc] sm:$0xf]
  %v132 = vld [vmem:[%s1 + $0x10] sm:$0xf]
  %s133 = scalar_lea.vmem %s2, 1
  %v134 = vld [vmem:[%s133] sm:$0x1]
  %v136 = vlaneseq
  %v137 = vshrl.u32 %v136, 7
  %v138 = vsub.s32 0, %v137
  %v139 = vrot.slane %v134, %v138
  %v145 = vunpack.c.l.b16 %v129
  %v146 = vunpack.c.l.b16 %v130
  %v147 = vunpack.c.l.b16 %v131
  %v148 = vunpack.c.l.b16 %v132
  %v149 = vpack.c.b16 %v146, %v145
  %v150 = vpack.c.b16 %v148, %v147
  %vm153 = vcmask 261120
  %v155 = vsel %vm153, %v125, 0
  %v158 = vsel %vm153, %v126, 0
  %v161 = vsel %vm153, %v127, 0
  %v164 = vsel %vm153, %v128, 0
  %166 = vmatprep.subr.bf16.mxu0 0
  %167 = vmatpush1.bf16.msra.mxu0 %v149
  %168 = vmatprep.subr.bf16.mxu0 0
  %169 = vmatpush1.bf16.msra.mxu0 %v150
  %170 = vmatprep.subr.bf16.mxu0 0
  %171 = vmatpush1.bf16.msra.mxu0 0
  %172 = vmatprep.subr.bf16.mxu0 0
  %173 = vmatpush1.bf16.msra.mxu0 0
  %174 = vmatprep.subr.bf16.mxu0 0
  %175 = vmatpush1.bf16.msra.mxu0 0
  %176 = vmatprep.subr.bf16.mxu0 0
  %177 = vmatpush1.bf16.msra.mxu0 0
  %178 = vmatprep.subr.bf16.mxu0 0
  %179 = vmatpush1.bf16.msra.mxu0 0
  %180 = vmatprep.subr.bf16.mxu0 0
  %181 = vmatpush1.bf16.msra.mxu0 0
  %182 = vmatprep.subr.bf16.mxu0 0
  %183 = vmatpush1.bf16.msra.mxu0 0
  %184 = vmatprep.subr.bf16.mxu0 0
  %185 = vmatpush1.bf16.msra.mxu0 0
  %186 = vmatprep.subr.bf16.mxu0 0
  %187 = vmatpush1.bf16.msra.mxu0 0
  %188 = vmatprep.subr.bf16.mxu0 0
  %189 = vmatpush1.bf16.msra.mxu0 0
  %190 = vmatprep.subr.bf16.mxu0 0
  %191 = vmatpush1.bf16.msra.mxu0 0
  %192 = vmatprep.subr.bf16.mxu0 0
  %193 = vmatpush1.bf16.msra.mxu0 0
  %194 = vmatprep.subr.bf16.mxu0 0
  %195 = vmatpush1.bf16.msra.mxu0 0
  %196 = vmatprep.subr.bf16.mxu0 0
  %197 = vmatpush1.bf16.msra.mxu0 0
  %198 = vmatprep.mubr.bf16.mxu0 0
  %199 = vmatmul.mubr.bf16.gmra.mrb[0].mxu0 %v155
  %v200 = vpop.f32.mrb[0].mxu0
  %v201 = vadd.f32 %v139, %v200
  %v202 = vpop.f32.mrb[0].mxu0
  %v203 = vpop.f32.mrb[0].mxu0
  %v204 = vadd.f32 %v139, %v203
  %v205 = vpop.f32.mrb[0].mxu0
  %206 = vmatprep.mubr.bf16.mxu0 0
  %207 = vmatmul.mubr.bf16.gmra.mrb[0].mxu0 %v158
  %v208 = vpop.f32.mrb[0].mxu0
  %v209 = vadd.f32 %v139, %v208
  %v210 = vpop.f32.mrb[0].mxu0
  %v211 = vpop.f32.mrb[0].mxu0
  %v212 = vadd.f32 %v139, %v211
  %v213 = vpop.f32.mrb[0].mxu0
  %214 = vmatprep.mubr.bf16.mxu0 0
  %215 = vmatmul.mubr.bf16.gmra.mrb[0].mxu0 %v161
  %v216 = vpop.f32.mrb[0].mxu0
  %v217 = vadd.f32 %v139, %v216
  %v218 = vpop.f32.mrb[0].mxu0
  %v219 = vpop.f32.mrb[0].mxu0
  %v220 = vadd.f32 %v139, %v219
  %v221 = vpop.f32.mrb[0].mxu0
  %222 = vmatprep.mubr.bf16.mxu0 0
  %223 = vmatmul.mubr.bf16.gmra.mrb[0].mxu0 %v164
  %v224 = vpop.f32.mrb[0].mxu0
  %v225 = vadd.f32 %v139, %v224
  %v226 = vpop.f32.mrb[0].mxu0
  %v227 = vpop.f32.mrb[0].mxu0
  %v228 = vadd.f32 %v139, %v227
  %v229 = vpop.f32.mrb[0].mxu0
  %230 = vdwg.mxu0
  %v231 = vmax.f32 %v201, 0.0
  %v232 = vmax.f32 %v204, 0.0
  %v233 = vmax.f32 %v209, 0.0
  %v234 = vmax.f32 %v212, 0.0
  %v235 = vmax.f32 %v217, 0.0
  %v236 = vmax.f32 %v220, 0.0
  %v237 = vmax.f32 %v225, 0.0
  %v238 = vmax.f32 %v228, 0.0
  %v239 = vpack.c.bf16 %v232, %v231
  %v240 = vpack.c.bf16 %v234, %v233
  %v241 = vpack.c.bf16 %v236, %v235
  %v242 = vpack.c.bf16 %v238, %v237
  %v243 = vld [vmem:[%s1 + $0x14] sm:$0xf]
  %v244 = vld [vmem:[%s1 + $0x18] sm:$0xf]
  %v245 = vld [vmem:[%s1 + $0x1c] sm:$0xf]
  %v246 = vld [vmem:[%s1 + $0x20] sm:$0xf]
  %s247 = scalar_lea.vmem %s2, 2
  %v248 = vld [vmem:[%s247] sm:$0x1]
  %v250 = vlaneseq
  %v251 = vshrl.u32 %v250, 7
  %v252 = vsub.s32 0, %v251
  %v253 = vrot.slane %v248, %v252
  %v259 = vunpack.c.l.b16 %v243
  %v260 = vunpack.c.l.b16 %v244
  %v261 = vunpack.c.l.b16 %v245
  %v262 = vunpack.c.l.b16 %v246
  %v263 = vpack.c.b16 %v260, %v259
  %v264 = vpack.c.b16 %v262, %v261
  %v268 = vsel %vm153, %v239, 0
  %v271 = vsel %vm153, %v240, 0
  %v274 = vsel %vm153, %v241, 0
  %v277 = vsel %vm153, %v242, 0
  %279 = vmatprep.subr.bf16.mxu0 0
  %280 = vmatpush1.bf16.msra.mxu0 %v263
  %281 = vmatprep.subr.bf16.mxu0 0
  %282 = vmatpush1.bf16.msra.mxu0 %v264
  %283 = vmatprep.subr.bf16.mxu0 0
  %284 = vmatpush1.bf16.msra.mxu0 0
  %285 = vmatprep.subr.bf16.mxu0 0
  %286 = vmatpush1.bf16.msra.mxu0 0
  %287 = vmatprep.subr.bf16.mxu0 0
  %288 = vmatpush1.bf16.msra.mxu0 0
  %289 = vmatprep.subr.bf16.mxu0 0
  %290 = vmatpush1.bf16.msra.mxu0 0
  %291 = vmatprep.subr.bf16.mxu0 0
  %292 = vmatpush1.bf16.msra.mxu0 0
  %293 = vmatprep.subr.bf16.mxu0 0
  %294 = vmatpush1.bf16.msra.mxu0 0
  %295 = vmatprep.subr.bf16.mxu0 0
  %296 = vmatpush1.bf16.msra.mxu0 0
  %297 = vmatprep.subr.bf16.mxu0 0
  %298 = vmatpush1.bf16.msra.mxu0 0
  %299 = vmatprep.subr.bf16.mxu0 0
  %300 = vmatpush1.bf16.msra.mxu0 0
  %301 = vmatprep.subr.bf16.mxu0 0
  %302 = vmatpush1.bf16.msra.mxu0 0
  %303 = vmatprep.subr.bf16.mxu0 0
  %304 = vmatpush1.bf16.msra.mxu0 0
  %305 = vmatprep.subr.bf16.mxu0 0
  %306 = vmatpush1.bf16.msra.mxu0 0
  %307 = vmatprep.subr.bf16.mxu0 0
  %308 = vmatpush1.bf16.msra.mxu0 0
  %309 = vmatprep.subr.bf16.mxu0 0
  %310 = vmatpush1.bf16.msra.mxu0 0
  %311 = vmatprep.mubr.bf16.mxu0 0
  %312 = vmatmul.mubr.bf16.gmra.mrb[0].mxu0 %v268
  %v313 = vpop.f32.mrb[0].mxu0
  %v314 = vadd.f32 %v253, %v313
  %v315 = vpop.f32.mrb[0].mxu0
  %v316 = vpop.f32.mrb[0].mxu0
  %v317 = vadd.f32 %v253, %v316
  %v318 = vpop.f32.mrb[0].mxu0
  %319 = vmatprep.mubr.bf16.mxu0 0
  %320 = vmatmul.mubr.bf16.gmra.mrb[0].mxu0 %v271
  %v321 = vpop.f32.mrb[0].mxu0
  %v322 = vadd.f32 %v253, %v321
  %v323 = vpop.f32.mrb[0].mxu0
  %v324 = vpop.f32.mrb[0].mxu0
  %v325 = vadd.f32 %v253, %v324
  %v326 = vpop.f32.mrb[0].mxu0
  %327 = vmatprep.mubr.bf16.mxu0 0
  %328 = vmatmul.mubr.bf16.gmra.mrb[0].mxu0 %v274
  %v329 = vpop.f32.mrb[0].mxu0
  %v330 = vadd.f32 %v253, %v329
  %v331 = vpop.f32.mrb[0].mxu0
  %v332 = vpop.f32.mrb[0].mxu0
  %v333 = vadd.f32 %v253, %v332
  %v334 = vpop.f32.mrb[0].mxu0
  %335 = vmatprep.mubr.bf16.mxu0 0
  %336 = vmatmul.mubr.bf16.gmra.mrb[0].mxu0 %v277
  %v337 = vpop.f32.mrb[0].mxu0
  %v338 = vadd.f32 %v253, %v337
  %v339 = vpop.f32.mrb[0].mxu0
  %v340 = vpop.f32.mrb[0].mxu0
  %v341 = vadd.f32 %v253, %v340
  %v342 = vpop.f32.mrb[0].mxu0
  %343 = vdwg.mxu0
  %v344 = vmax.f32 %v314, 0.0
  %v345 = vmax.f32 %v317, 0.0
  %v346 = vmax.f32 %v322, 0.0
  %v347 = vmax.f32 %v325, 0.0
  %v348 = vmax.f32 %v330, 0.0
  %v349 = vmax.f32 %v333, 0.0
  %v350 = vmax.f32 %v338, 0.0
  %v351 = vmax.f32 %v341, 0.0
  %v352 = vpack.c.bf16 %v345, %v344
  %v353 = vpack.c.bf16 %v347, %v346
  %v354 = vpack.c.bf16 %v349, %v348
  %v355 = vpack.c.bf16 %v351, %v350
  %v356 = vld [vmem:[%s1 + $0x24] sm:$0xf]
  %v357 = vld [vmem:[%s1 + $0x28] sm:$0xf]
  %v358 = vld [vmem:[%s1 + $0x2c] sm:$0xf]
  %v359 = vld [vmem:[%s1 + $0x30] sm:$0xf]
  %s360 = scalar_lea.vmem %s2, 3
  %v361 = vld [vmem:[%s360] sm:$0x1]
  %v363 = vlaneseq
  %v364 = vshrl.u32 %v363, 7
  %v365 = vsub.s32 0, %v364
  %v366 = vrot.slane %v361, %v365
  %v372 = vunpack.c.l.b16 %v356
  %v373 = vunpack.c.l.b16 %v357
  %v374 = vunpack.c.l.b16 %v358
  %v375 = vunpack.c.l.b16 %v359
  %v376 = vpack.c.b16 %v373, %v372
  %v377 = vpack.c.b16 %v375, %v374
  %v381 = vsel %vm153, %v352, 0
  %v384 = vsel %vm153, %v353, 0
  %v387 = vsel %vm153, %v354, 0
  %v390 = vsel %vm153, %v355, 0
  %392 = vmatprep.subr.bf16.mxu0 0
  %393 = vmatpush1.bf16.msra.mxu0 %v376
  %394 = vmatprep.subr.bf16.mxu0 0
  %395 = vmatpush1.bf16.msra.mxu0 %v377
  %396 = vmatprep.subr.bf16.mxu0 0
  %397 = vmatpush1.bf16.msra.mxu0 0
  %398 = vmatprep.subr.bf16.mxu0 0
  %399 = vmatpush1.bf16.msra.mxu0 0
  %400 = vmatprep.subr.bf16.mxu0 0
  %401 = vmatpush1.bf16.msra.mxu0 0
  %402 = vmatprep.subr.bf16.mxu0 0
  %403 = vmatpush1.bf16.msra.mxu0 0
  %404 = vmatprep.subr.bf16.mxu0 0
  %405 = vmatpush1.bf16.msra.mxu0 0
  %406 = vmatprep.subr.bf16.mxu0 0
  %407 = vmatpush1.bf16.msra.mxu0 0
  %408 = vmatprep.subr.bf16.mxu0 0
  %409 = vmatpush1.bf16.msra.mxu0 0
  %410 = vmatprep.subr.bf16.mxu0 0
  %411 = vmatpush1.bf16.msra.mxu0 0
  %412 = vmatprep.subr.bf16.mxu0 0
  %413 = vmatpush1.bf16.msra.mxu0 0
  %414 = vmatprep.subr.bf16.mxu0 0
  %415 = vmatpush1.bf16.msra.mxu0 0
  %416 = vmatprep.subr.bf16.mxu0 0
  %417 = vmatpush1.bf16.msra.mxu0 0
  %418 = vmatprep.subr.bf16.mxu0 0
  %419 = vmatpush1.bf16.msra.mxu0 0
  %420 = vmatprep.subr.bf16.mxu0 0
  %421 = vmatpush1.bf16.msra.mxu0 0
  %422 = vmatprep.subr.bf16.mxu0 0
  %423 = vmatpush1.bf16.msra.mxu0 0
  %424 = vmatprep.mubr.bf16.mxu0 0
  %425 = vmatmul.mubr.bf16.gmra.mrb[0].mxu0 %v381
  %v426 = vpop.f32.mrb[0].mxu0
  %v427 = vadd.f32 %v366, %v426
  %v428 = vpop.f32.mrb[0].mxu0
  %v429 = vpop.f32.mrb[0].mxu0
  %v430 = vadd.f32 %v366, %v429
  %v431 = vpop.f32.mrb[0].mxu0
  %432 = vmatprep.mubr.bf16.mxu0 0
  %433 = vmatmul.mubr.bf16.gmra.mrb[0].mxu0 %v384
  %v434 = vpop.f32.mrb[0].mxu0
  %v435 = vadd.f32 %v366, %v434
  %v436 = vpop.f32.mrb[0].mxu0
  %v437 = vpop.f32.mrb[0].mxu0
  %v438 = vadd.f32 %v366, %v437
  %v439 = vpop.f32.mrb[0].mxu0
  %440 = vmatprep.mubr.bf16.mxu0 0
  %441 = vmatmul.mubr.bf16.gmra.mrb[0].mxu0 %v387
  %v442 = vpop.f32.mrb[0].mxu0
  %v443 = vadd.f32 %v366, %v442
  %v444 = vpop.f32.mrb[0].mxu0
  %v445 = vpop.f32.mrb[0].mxu0
  %v446 = vadd.f32 %v366, %v445
  %v447 = vpop.f32.mrb[0].mxu0
  %448 = vmatprep.mubr.bf16.mxu0 0
  %449 = vmatmul.mubr.bf16.gmra.mrb[0].mxu0 %v390
  %v450 = vpop.f32.mrb[0].mxu0
  %v451 = vadd.f32 %v366, %v450
  %v452 = vpop.f32.mrb[0].mxu0
  %v453 = vpop.f32.mrb[0].mxu0
  %v454 = vadd.f32 %v366, %v453
  %v455 = vpop.f32.mrb[0].mxu0
  %456 = vdwg.mxu0
  %vm457 = vcmask 31744
  %458 = vst.msk [vmem:[%s3] sm:$0xff] %vm457, %v427
  %459 = vst.msk [vmem:[%s3 + $0x8] sm:$0xff] %vm457, %v430
  %460 = vst.msk [vmem:[%s3 + $0x10] sm:$0xff] %vm457, %v435
  %461 = vst.msk [vmem:[%s3 + $0x18] sm:$0xff] %vm457, %v438
  %462 = vst.msk [vmem:[%s3 + $0x20] sm:$0xff] %vm457, %v443
  %463 = vst.msk [vmem:[%s3 + $0x28] sm:$0xff] %vm457, %v446
  %464 = vst.msk [vmem:[%s3 + $0x30] sm:$0xff] %vm457, %v451
  %465 = vst.msk [vmem:[%s3 + $0x38] sm:$0xff] %vm457, %v454
  // Predicated region
  $region14: #{tpu_custom_call.1} parent=0 // pred_check
    _
  $region15: #{tpu_custom_call.1} parent=0 // pred_check_branch
    %467 = sbr.rel (0) target = $region17
  $region16: #{tpu_custom_call.1} parent=0 // pred_region
    _
  $region17: #{tpu_custom_call.1} parent=0 // pred_fallthru
    _
  // Predicated region
  $region18: #{tpu_custom_call.1} parent=0 // pred_check
    _
  $region19: #{tpu_custom_call.1} parent=0 // pred_check_branch
    %469 = sbr.rel (0) target = $region21
  $region20: #{tpu_custom_call.1} parent=0 // pred_region
    _
  $region21: #{tpu_custom_call.1} parent=0 // pred_fallthru
    _

</llo_original>
